<compile_context>
chip_gen: v7x
topology: tpu7x:2x2x1
jax: 0.10.0
libtpu: 0.0.40
codegen_flags: <defaults>
</compile_context>

<pallas_src>
import jax
import jax.numpy as jnp
from jax import lax
from jax.experimental import pallas as pl
from jax.experimental.pallas import tpu as pltpu


def _round_up(x, m):
    return ((x + m - 1) // m) * m


def _cdiv(a, b):
    return (a + b - 1) // b


def _count_tokens(tok, tv, vocab_base, seq_len):
    """counts[b, v] = #{s : tok[b, s] == vocab_base + v}; int32, shape (TB, TV)."""
    tb = tok.shape[0]
    vocab_iota = lax.broadcasted_iota(jnp.int32, (tb, tv), 1) + vocab_base
    counts = jnp.zeros((tb, tv), jnp.int32)
    # Static unroll over the (modest) sentence length; the int32 accumulator
    # stays vreg resident (TB*TV is capped in the wrapper) and is converted to
    # the matmul dtype exactly once after the loop.
    # TODO(synk): for very long S this would become a lax.fori_loop once
    # dynamic minormost-lane slicing of the token block lowers cleanly.
    for s in range(seq_len):
        counts = counts + (tok[:, s:s + 1] == vocab_iota).astype(jnp.int32)
    return counts


def _make_fused_kernel(seq_len, tv, compute_dtype):
    """out = counts @ fused_table + bias, accumulated over vocab tiles."""

    def kernel(tok_ref, fused_ref, b_ref, out_ref, acc_ref):
        k = pl.program_id(1)

        @pl.when(k == 0)
        def _():
            acc_ref[...] = jnp.zeros_like(acc_ref)

        counts = _count_tokens(tok_ref[...], tv, k * tv, seq_len)
        acc_ref[...] += jnp.dot(counts.astype(compute_dtype), fused_ref[...],
                                preferred_element_type=jnp.float32)

        @pl.when(k == pl.num_programs(1) - 1)
        def _():
            out_ref[...] = (acc_ref[...] + b_ref[...]).astype(out_ref.dtype)

    return kernel


def _make_two_matmul_kernel(seq_len, tv, compute_dtype):
    """sum_emb = counts @ emb (accumulated over vocab tiles); out = sum_emb @ W + b."""

    def kernel(tok_ref, emb_ref, w_ref, b_ref, out_ref, acc_ref):
        k = pl.program_id(1)

        @pl.when(k == 0)
        def _():
            acc_ref[...] = jnp.zeros_like(acc_ref)

        counts = _count_tokens(tok_ref[...], tv, k * tv, seq_len)
        acc_ref[...] += jnp.dot(counts.astype(compute_dtype), emb_ref[...],
                                preferred_element_type=jnp.float32)

        @pl.when(k == pl.num_programs(1) - 1)
        def _():
            summed = acc_ref[...]
            if compute_dtype != jnp.dtype(jnp.float32):
                summed = summed.astype(compute_dtype)
            out_ref[...] = (jnp.dot(summed, w_ref[...],
                                    preferred_element_type=jnp.float32)
                            + b_ref[...]).astype(out_ref.dtype)

    return kernel


def nlimodel_forward(tinputs, tinputs_len, emb_table, w_t, bias, *,
                     batch_tile=None, vocab_tile=None, fuse="auto",
                     matmul_dtype=jnp.float32):
    """Pallas implementation of nlimodel.forward.

    tinputs:     [B, S] int32 token ids
    tinputs_len: [B]    int32 (unused by the PyTorch forward; kept for parity)
    emb_table:   [V, E] float32 (row 0 is zero: padding_idx=0)
    w_t:         [E, O] float32 (PyTorch Linear weight transposed)
    bias:        [O] or [1, O] float32
    returns:     [B, O] float32
    """
    del tinputs_len  # not used by the reference forward
    B, S = tinputs.shape
    V, E = emb_table.shape
    O = w_t.shape[1]
    compute_dtype = jnp.dtype(matmul_dtype)

    O_pad = _round_up(O, 128)                      # lane-dense output store

    if fuse == "auto":
        # Fusing emb @ W shrinks resident weights and removes the tiny-K second
        # matmul whenever the fused table is no wider than the embedding.
        fuse = O_pad <= E

    # Vocab tile: lane-dense (multiple of 128); pad the vocab up to it.
    if vocab_tile is None:
        TV = min(512, _round_up(V, 128))
    else:
        TV = _round_up(vocab_tile, 128)
    V_pad = _round_up(V, TV)
    n_vtiles = V_pad // TV

    # Batch tile: multiple of 8, sized so the (TB, TV) counts slab stays
    # ~vreg resident; prefer >= 2 batch tiles when the batch allows (megacore).
    if batch_tile is None:
        cap = max(8, min(128, ((32768 // TV) // 8) * 8))
        TB = min(cap, _round_up(B, 8))
        if TB > 8 and _cdiv(B, TB) < 2 and _round_up(B, 8) >= 16:
            TB = _round_up(_cdiv(_round_up(B, 8), 2), 8)
    else:
        TB = max(8, _round_up(batch_tile, 8))      # guard the (8,128) constraint
    B_pad = _round_up(B, TB)
    n_btiles = B_pad // TB

    # --- host-side operand prep (all padding is zeros) ---
    tok_p = tinputs.astype(jnp.int32)
    if B_pad != B:
        tok_p = jnp.pad(tok_p, ((0, B_pad - B), (0, 0)))   # padded rows sliced away

    bias_p = jnp.asarray(bias, jnp.float32).reshape(1, O)
    if O_pad != O:
        bias_p = jnp.pad(bias_p, ((0, 0), (0, O_pad - O)))

    if fuse:
        fused = jnp.asarray(emb_table, jnp.float32) @ jnp.asarray(w_t, jnp.float32)
        fused = jnp.pad(fused, ((0, V_pad - V), (0, O_pad - O))).astype(compute_dtype)
        stream_width = O_pad
    else:
        emb_p = jnp.pad(jnp.asarray(emb_table, jnp.float32),
                        ((0, V_pad - V), (0, 0))).astype(compute_dtype)
        w_p = jnp.pad(jnp.asarray(w_t, jnp.float32),
                      ((0, 0), (0, O_pad - O))).astype(compute_dtype)
        stream_width = E

    # Rough VMEM budget; raise the scoped limit only when needed (keeps the
    # same source portable across v5e/v6e/v7x: cap well under v7x's 64 MiB).
    itemsize = compute_dtype.itemsize
    acc_width = O_pad if fuse else E
    vmem_est = (2 * TB * S * 4                          # token blocks (2 bufs)
                + 2 * TV * stream_width * itemsize      # streamed table blocks
                + (0 if fuse else E * O_pad * itemsize) # resident W
                + O_pad * 4                             # bias
                + 2 * TB * O_pad * 4                    # output blocks
                + TB * acc_width * 4                    # f32 accumulator scratch
                + 2 * TB * TV * 4)                      # counts slab + temps
    compiler_kwargs = dict(dimension_semantics=("parallel", "arbitrary"))
    if vmem_est > 16 * 1024 * 1024:
        compiler_kwargs["vmem_limit_bytes"] = min(
            int(1.5 * vmem_est) + (8 << 20), 48 * 1024 * 1024)

    grid = (n_btiles, n_vtiles)
    out_shape = jax.ShapeDtypeStruct((B_pad, O_pad), jnp.float32)

    def call(single_buffer_constants):
        def const_spec(shape):
            # Grid-invariant operands: single-buffer so double-buffering does
            # not double their VMEM footprint.
            if single_buffer_constants:
                return pl.BlockSpec(shape, lambda i, k: (0, 0),
                                    pipeline_mode=pl.Buffered(1))
            return pl.BlockSpec(shape, lambda i, k: (0, 0))

        tok_spec = pl.BlockSpec((TB, S), lambda i, k: (i, 0))
        out_spec = pl.BlockSpec((TB, O_pad), lambda i, k: (i, 0))

        if fuse:
            kernel = _make_fused_kernel(S, TV, compute_dtype)
            in_specs = [tok_spec,
                        pl.BlockSpec((TV, O_pad), lambda i, k: (k, 0)),  # streams
                        const_spec((1, O_pad))]
            args = (tok_p, fused, bias_p)
        else:
            kernel = _make_two_matmul_kernel(S, TV, compute_dtype)
            in_specs = [tok_spec,
                        pl.BlockSpec((TV, E), lambda i, k: (k, 0)),      # streams
                        const_spec((E, O_pad)),
                        const_spec((1, O_pad))]
            args = (tok_p, emb_p, w_p, bias_p)

        return pl.pallas_call(
            kernel,
            out_shape=out_shape,
            grid_spec=pltpu.PrefetchScalarGridSpec(
                num_scalar_prefetch=0,
                grid=grid,
                in_specs=in_specs,
                out_specs=out_spec,
                scratch_shapes=[pltpu.VMEM((TB, acc_width), jnp.float32)],
            ),
            compiler_params=pltpu.CompilerParams(**compiler_kwargs),
        )(*args)

    try:
        out = call(single_buffer_constants=True)
    except Exception:  # pragma: no cover - fallback if Buffered(1) unsupported
        out = call(single_buffer_constants=False)

    return out[:B, :O]


if __name__ == "__main__":
    def reference_forward(tinputs, emb_table, w_t, bias):
        word_embedding = emb_table[tinputs]            # [B, S, E]
        summed = jnp.sum(word_embedding, axis=1)       # [B, E]
        return jnp.matmul(summed, w_t,
                          precision=jax.lax.Precision.HIGHEST) + bias.reshape(1, -1)

    def make_case(key, vocab, emb_dim, out_dim, batch, seq, w_scale=0.1):
        k_emb, k_w, k_b, k_tok, k_len = jax.random.split(key, 5)
        emb_table = jax.random.normal(k_emb, (vocab, emb_dim), dtype=jnp.float32)
        emb_table = emb_table.at[0].set(0.0)           # padding_idx=0 -> zero row
        w_t = jax.random.normal(k_w, (emb_dim, out_dim), dtype=jnp.float32) * w_scale
        bias = jax.random.normal(k_b, (1, out_dim), dtype=jnp.float32) * w_scale
        tok = jax.random.randint(k_tok, (batch, seq), 0, vocab, dtype=jnp.int32)
        tok_len = jax.random.randint(k_len, (batch,), 1, seq + 1, dtype=jnp.int32)
        return emb_table, w_t, bias, tok, tok_len

    key = jax.random.PRNGKey(0)
    k1, k2 = jax.random.split(key)

    # 1) Module-scale config: vocab=32, embedding_dim=hidden_size=32,
    #    output_size=8, batch=2, seq=8 (auto -> two-matmul path, O_pad > E).
    emb, w, b, tok, tlen = make_case(k1, vocab=32, emb_dim=32, out_dim=8,
                                     batch=2, seq=8)
    out = jax.block_until_ready(nlimodel_forward(tok, tlen, emb, w, b))
    ref = reference_forward(tok, emb, w, b)
    assert out.shape == ref.shape
    assert jnp.allclose(out, ref, atol=2e-4, rtol=2e-4), (out, ref)

    # 2) Larger config exercising the fused path, vocab streaming (2 vocab
    #    tiles) and batch tiling/padding (2 batch tiles), f32 matmuls.
    emb2, w2, b2, tok2, tlen2 = make_case(k2, vocab=1000, emb_dim=256,
                                          out_dim=64, batch=40, seq=48)
    ref2 = reference_forward(tok2, emb2, w2, b2)
    out2 = jax.block_until_ready(nlimodel_forward(tok2, tlen2, emb2, w2, b2))
    assert jnp.allclose(out2, ref2, atol=1e-2, rtol=1e-2), "fused path mismatch"

    # 3) Same config, forced two-matmul path (multi-vocab-tile accumulation).
    out3 = jax.block_until_ready(
        nlimodel_forward(tok2, tlen2, emb2, w2, b2, fuse=False))
    assert jnp.allclose(out3, ref2, atol=1e-2, rtol=1e-2), "two-matmul path mismatch"

    # 4) bf16 matmul path (counts exact in bf16; table cast loses ~0.2% rel).
    out4 = jax.block_until_ready(
        nlimodel_forward(tok2, tlen2, emb2, w2, b2, matmul_dtype=jnp.bfloat16))
    assert jnp.allclose(out4, ref2, atol=0.5, rtol=0.05), "bf16 path mismatch"

    print("KERNEL_OK")
</pallas_src>

<mosaic_0001>
module attributes {stable_mosaic.version = 11 : i64} {
  func.func @kernel(%arg0: i32, %arg1: i32, %arg2: memref<8x8xi32, #tpu.memory_space<vmem>>, %arg3: memref<128x32xf32, #tpu.memory_space<vmem>>, %arg4: memref<32x128xf32, #tpu.memory_space<vmem>>, %arg5: memref<1x128xf32, #tpu.memory_space<vmem>>, %arg6: memref<8x128xf32, #tpu.memory_space<vmem>>, %arg7: memref<8x32xf32, #tpu.memory_space<vmem>>) attributes {dimension_semantics = [#tpu.dimension_semantics<parallel>, #tpu.dimension_semantics<arbitrary>], iteration_bounds = array<i64: 1, 1>, scalar_prefetch = 0 : i64, scratch_operands = 1 : i64, tpu.core_type = #tpu.core_type<tc>, window_params = [{transform_indices = @transform_0, window_bounds = array<i64: 8, 8>}, {transform_indices = @transform_1, window_bounds = array<i64: 128, 32>}, {pipeline_mode = #tpu.pipeline_mode<synchronous>, transform_indices = @transform_2, window_bounds = array<i64: 32, 128>}, {pipeline_mode = #tpu.pipeline_mode<synchronous>, transform_indices = @transform_3, window_bounds = array<i64: 1, 128>}, {transform_indices = @transform_4, window_bounds = array<i64: 8, 128>}]} {
    %c0_i32 = arith.constant 0 : i32
    %0 = arith.cmpi eq, %arg1, %c0_i32 : i32
    %1 = arith.extui %0 : i1 to i32
    %c0_i32_0 = arith.constant 0 : i32
    %2 = arith.cmpi ne, %1, %c0_i32_0 : i32
    scf.if %2 {
      %cst_11 = arith.constant 0.000000e+00 : f32
      %58 = vector.broadcast %cst_11 : f32 to vector<8x32xf32>
      %c0_12 = arith.constant 0 : index
      %c0_13 = arith.constant 0 : index
      %59 = vector.load %arg7[%c0_12, %c0_13] : memref<8x32xf32, #tpu.memory_space<vmem>>, vector<8x32xf32>
      tpu.vector_store %arg7[%c0_12, %c0_13], %58 {strides = array<i32>} : memref<8x32xf32, #tpu.memory_space<vmem>>, vector<8x32xf32>,
    } else {
    }
    %c0 = arith.constant 0 : index
    %c0_1 = arith.constant 0 : index
    %3 = vector.load %arg2[%c0, %c0_1] : memref<8x8xi32, #tpu.memory_space<vmem>>, vector<8x8xi32>
    %c128_i32 = arith.constant 128 : i32
    %4 = arith.muli %arg1, %c128_i32 : i32
    %5 = tpu.iota {dimensions = array<i32: 1>} : vector<8x128xi32>
    %6 = vector.broadcast %4 : i32 to vector<8x128xi32>
    %7 = arith.addi %5, %6 : vector<8x128xi32>
    %c0_i32_2 = arith.constant 0 : i32
    %8 = vector.broadcast %c0_i32_2 : i32 to vector<8x128xi32>
    %9 = vector.extract_strided_slice %3 {offsets = [0, 0], sizes = [8, 1], strides = [1, 1]} : vector<8x8xi32> to vector<8x1xi32>
    %10 = vector.broadcast %9 : vector<8x1xi32> to vector<8x128xi32>
    %11 = arith.cmpi eq, %10, %7 : vector<8x128xi32>
    %12 = arith.extui %11 : vector<8x128xi1> to vector<8x128xi32>
    %13 = arith.addi %8, %12 : vector<8x128xi32>
    %14 = vector.extract_strided_slice %3 {offsets = [0, 1], sizes = [8, 1], strides = [1, 1]} : vector<8x8xi32> to vector<8x1xi32>
    %15 = vector.broadcast %14 : vector<8x1xi32> to vector<8x128xi32>
    %16 = arith.cmpi eq, %15, %7 : vector<8x128xi32>
    %17 = arith.extui %16 : vector<8x128xi1> to vector<8x128xi32>
    %18 = arith.addi %13, %17 : vector<8x128xi32>
    %19 = vector.extract_strided_slice %3 {offsets = [0, 2], sizes = [8, 1], strides = [1, 1]} : vector<8x8xi32> to vector<8x1xi32>
    %20 = vector.broadcast %19 : vector<8x1xi32> to vector<8x128xi32>
    %21 = arith.cmpi eq, %20, %7 : vector<8x128xi32>
    %22 = arith.extui %21 : vector<8x128xi1> to vector<8x128xi32>
    %23 = arith.addi %18, %22 : vector<8x128xi32>
    %24 = vector.extract_strided_slice %3 {offsets = [0, 3], sizes = [8, 1], strides = [1, 1]} : vector<8x8xi32> to vector<8x1xi32>
    %25 = vector.broadcast %24 : vector<8x1xi32> to vector<8x128xi32>
    %26 = arith.cmpi eq, %25, %7 : vector<8x128xi32>
    %27 = arith.extui %26 : vector<8x128xi1> to vector<8x128xi32>
    %28 = arith.addi %23, %27 : vector<8x128xi32>
    %29 = vector.extract_strided_slice %3 {offsets = [0, 4], sizes = [8, 1], strides = [1, 1]} : vector<8x8xi32> to vector<8x1xi32>
    %30 = vector.broadcast %29 : vector<8x1xi32> to vector<8x128xi32>
    %31 = arith.cmpi eq, %30, %7 : vector<8x128xi32>
    %32 = arith.extui %31 : vector<8x128xi1> to vector<8x128xi32>
    %33 = arith.addi %28, %32 : vector<8x128xi32>
    %34 = vector.extract_strided_slice %3 {offsets = [0, 5], sizes = [8, 1], strides = [1, 1]} : vector<8x8xi32> to vector<8x1xi32>
    %35 = vector.broadcast %34 : vector<8x1xi32> to vector<8x128xi32>
    %36 = arith.cmpi eq, %35, %7 : vector<8x128xi32>
    %37 = arith.extui %36 : vector<8x128xi1> to vector<8x128xi32>
    %38 = arith.addi %33, %37 : vector<8x128xi32>
    %39 = vector.extract_strided_slice %3 {offsets = [0, 6], sizes = [8, 1], strides = [1, 1]} : vector<8x8xi32> to vector<8x1xi32>
    %40 = vector.broadcast %39 : vector<8x1xi32> to vector<8x128xi32>
    %41 = arith.cmpi eq, %40, %7 : vector<8x128xi32>
    %42 = arith.extui %41 : vector<8x128xi1> to vector<8x128xi32>
    %43 = arith.addi %38, %42 : vector<8x128xi32>
    %44 = vector.extract_strided_slice %3 {offsets = [0, 7], sizes = [8, 1], strides = [1, 1]} : vector<8x8xi32> to vector<8x1xi32>
    %45 = vector.broadcast %44 : vector<8x1xi32> to vector<8x128xi32>
    %46 = arith.cmpi eq, %45, %7 : vector<8x128xi32>
    %47 = arith.extui %46 : vector<8x128xi1> to vector<8x128xi32>
    %48 = arith.addi %43, %47 : vector<8x128xi32>
    %c0_3 = arith.constant 0 : index
    %c0_4 = arith.constant 0 : index
    %49 = vector.load %arg7[%c0_3, %c0_4] : memref<8x32xf32, #tpu.memory_space<vmem>>, vector<8x32xf32>
    %50 = arith.sitofp %48 : vector<8x128xi32> to vector<8x128xf32>
    %c0_5 = arith.constant 0 : index
    %c0_6 = arith.constant 0 : index
    %51 = vector.load %arg3[%c0_5, %c0_6] : memref<128x32xf32, #tpu.memory_space<vmem>>, vector<128x32xf32>
    %cst = arith.constant dense<0.000000e+00> : vector<8x32xf32>
    %52 = tpu.matmul %50, %51, %cst {dimension_numbers = #tpu.dot_dimension_numbers<[1], [0], [0], [1], [0, 0, 1, 1], [], []>} : vector<8x128xf32>, vector<128x32xf32>, vector<8x32xf32> -> vector<8x32xf32>
    %53 = arith.addf %49, %52 : vector<8x32xf32>
    %c0_7 = arith.constant 0 : index
    %c0_8 = arith.constant 0 : index
    %54 = vector.load %arg7[%c0_7, %c0_8] : memref<8x32xf32, #tpu.memory_space<vmem>>, vector<8x32xf32>
    tpu.vector_store %arg7[%c0_7, %c0_8], %53 {strides = array<i32>} : memref<8x32xf32, #tpu.memory_space<vmem>>, vector<8x32xf32>,
    %c0_i32_9 = arith.constant 0 : i32
    %55 = arith.cmpi eq, %arg1, %c0_i32_9 : i32
    %56 = arith.extui %55 : i1 to i32
    %c0_i32_10 = arith.constant 0 : i32
    %57 = arith.cmpi ne, %56, %c0_i32_10 : i32
    scf.if %57 {
      %c0_11 = arith.constant 0 : index
      %c0_12 = arith.constant 0 : index
      %58 = vector.load %arg7[%c0_11, %c0_12] : memref<8x32xf32, #tpu.memory_space<vmem>>, vector<8x32xf32>
      %c0_13 = arith.constant 0 : index
      %c0_14 = arith.constant 0 : index
      %59 = vector.load %arg4[%c0_13, %c0_14] : memref<32x128xf32, #tpu.memory_space<vmem>>, vector<32x128xf32>
      %cst_15 = arith.constant dense<0.000000e+00> : vector<8x128xf32>
      %60 = tpu.matmul %58, %59, %cst_15 {dimension_numbers = #tpu.dot_dimension_numbers<[1], [0], [0], [1], [0, 0, 1, 1], [], []>} : vector<8x32xf32>, vector<32x128xf32>, vector<8x128xf32> -> vector<8x128xf32>
      %c0_16 = arith.constant 0 : index
      %c0_17 = arith.constant 0 : index
      %61 = vector.load %arg5[%c0_16, %c0_17] : memref<1x128xf32, #tpu.memory_space<vmem>>, vector<1x128xf32>
      %62 = vector.broadcast %61 : vector<1x128xf32> to vector<8x128xf32>
      %63 = arith.addf %60, %62 : vector<8x128xf32>
      %c0_18 = arith.constant 0 : index
      %c0_19 = arith.constant 0 : index
      %64 = vector.load %arg6[%c0_18, %c0_19] : memref<8x128xf32, #tpu.memory_space<vmem>>, vector<8x128xf32>
      tpu.vector_store %arg6[%c0_18, %c0_19], %63 {strides = array<i32>} : memref<8x128xf32, #tpu.memory_space<vmem>>, vector<8x128xf32>,
    } else {
    }
    return
  }
  func.func @transform_0(%arg0: i32, %arg1: i32) -> (i32, i32) {
    %c0_i32 = arith.constant 0 : i32
    %c0_i32_0 = arith.constant 0 : i32
    return %arg0, %c0_i32 : i32, i32
  }
  func.func @transform_1(%arg0: i32, %arg1: i32) -> (i32, i32) {
    %c0_i32 = arith.constant 0 : i32
    %c0_i32_0 = arith.constant 0 : i32
    return %arg1, %c0_i32 : i32, i32
  }
  func.func @transform_2(%arg0: i32, %arg1: i32) -> (i32, i32) {
    %c0_i32 = arith.constant 0 : i32
    %c0_i32_0 = arith.constant 0 : i32
    %c0_i32_1 = arith.constant 0 : i32
    return %c0_i32, %c0_i32_0 : i32, i32
  }
  func.func @transform_3(%arg0: i32, %arg1: i32) -> (i32, i32) {
    %c0_i32 = arith.constant 0 : i32
    %c0_i32_0 = arith.constant 0 : i32
    %c0_i32_1 = arith.constant 0 : i32
    return %c0_i32, %c0_i32_0 : i32, i32
  }
  func.func @transform_4(%arg0: i32, %arg1: i32) -> (i32, i32) {
    %c0_i32 = arith.constant 0 : i32
    %c0_i32_0 = arith.constant 0 : i32
    return %arg0, %c0_i32 : i32, i32
  }
}

module attributes {stable_mosaic.version = 11 : i64} {
  func.func @kernel(%arg0: i32, %arg1: i32, %arg2: memref<8x8xi32, #tpu.memory_space<vmem>>, %arg3: memref<128x32xf32, #tpu.memory_space<vmem>>, %arg4: memref<32x128xf32, #tpu.memory_space<vmem>>, %arg5: memref<1x128xf32, #tpu.memory_space<vmem>>, %arg6: memref<8x128xf32, #tpu.memory_space<vmem>>, %arg7: memref<8x32xf32, #tpu.memory_space<vmem>>) attributes {dimension_semantics = [#tpu.dimension_semantics<parallel>, #tpu.dimension_semantics<arbitrary>], iteration_bounds = array<i64: 1, 1>, scalar_prefetch = 0 : i64, scratch_operands = 1 : i64, tpu.core_type = #tpu.core_type<tc>, window_params = [{transform_indices = @transform_0, window_bounds = array<i64: 8, 8>}, {transform_indices = @transform_1, window_bounds = array<i64: 128, 32>}, {pipeline_mode = #tpu.pipeline_mode<synchronous>, transform_indices = @transform_2, window_bounds = array<i64: 32, 128>}, {pipeline_mode = #tpu.pipeline_mode<synchronous>, transform_indices = @transform_3, window_bounds = array<i64: 1, 128>}, {transform_indices = @transform_4, window_bounds = array<i64: 8, 128>}]} {
    %c0_i32 = arith.constant 0 : i32
    %0 = arith.cmpi eq, %arg1, %c0_i32 : i32
    %1 = arith.extui %0 : i1 to i32
    %c0_i32_0 = arith.constant 0 : i32
    %2 = arith.cmpi ne, %1, %c0_i32_0 : i32
    scf.if %2 {
      %cst_11 = arith.constant 0.000000e+00 : f32
      %58 = vector.broadcast %cst_11 : f32 to vector<8x32xf32>
      %c0_12 = arith.constant 0 : index
      %c0_13 = arith.constant 0 : index
      %59 = vector.load %arg7[%c0_12, %c0_13] : memref<8x32xf32, #tpu.memory_space<vmem>>, vector<8x32xf32>
      tpu.vector_store %arg7[%c0_12, %c0_13], %58 {strides = array<i32>} : memref<8x32xf32, #tpu.memory_space<vmem>>, vector<8x32xf32>,
    } else {
    }
    %c0 = arith.constant 0 : index
    %c0_1 = arith.constant 0 : index
    %3 = vector.load %arg2[%c0, %c0_1] : memref<8x8xi32, #tpu.memory_space<vmem>>, vector<8x8xi32>
    %c128_i32 = arith.constant 128 : i32
    %4 = arith.muli %arg1, %c128_i32 : i32
    %5 = tpu.iota {dimensions = array<i32: 1>} : vector<8x128xi32>
    %6 = vector.broadcast %4 : i32 to vector<8x128xi32>
    %7 = arith.addi %5, %6 : vector<8x128xi32>
    %c0_i32_2 = arith.constant 0 : i32
    %8 = vector.broadcast %c0_i32_2 : i32 to vector<8x128xi32>
    %9 = vector.extract_strided_slice %3 {offsets = [0, 0], sizes = [8, 1], strides = [1, 1]} : vector<8x8xi32> to vector<8x1xi32>
    %10 = vector.broadcast %9 : vector<8x1xi32> to vector<8x128xi32>
    %11 = arith.cmpi eq, %10, %7 : vector<8x128xi32>
    %12 = arith.extui %11 : vector<8x128xi1> to vector<8x128xi32>
    %13 = arith.addi %8, %12 : vector<8x128xi32>
    %14 = vector.extract_strided_slice %3 {offsets = [0, 1], sizes = [8, 1], strides = [1, 1]} : vector<8x8xi32> to vector<8x1xi32>
    %15 = vector.broadcast %14 : vector<8x1xi32> to vector<8x128xi32>
    %16 = arith.cmpi eq, %15, %7 : vector<8x128xi32>
    %17 = arith.extui %16 : vector<8x128xi1> to vector<8x128xi32>
    %18 = arith.addi %13, %17 : vector<8x128xi32>
    %19 = vector.extract_strided_slice %3 {offsets = [0, 2], sizes = [8, 1], strides = [1, 1]} : vector<8x8xi32> to vector<8x1xi32>
    %20 = vector.broadcast %19 : vector<8x1xi32> to vector<8x128xi32>
    %21 = arith.cmpi eq, %20, %7 : vector<8x128xi32>
    %22 = arith.extui %21 : vector<8x128xi1> to vector<8x128xi32>
    %23 = arith.addi %18, %22 : vector<8x128xi32>
    %24 = vector.extract_strided_slice %3 {offsets = [0, 3], sizes = [8, 1], strides = [1, 1]} : vector<8x8xi32> to vector<8x1xi32>
    %25 = vector.broadcast %24 : vector<8x1xi32> to vector<8x128xi32>
    %26 = arith.cmpi eq, %25, %7 : vector<8x128xi32>
    %27 = arith.extui %26 : vector<8x128xi1> to vector<8x128xi32>
    %28 = arith.addi %23, %27 : vector<8x128xi32>
    %29 = vector.extract_strided_slice %3 {offsets = [0, 4], sizes = [8, 1], strides = [1, 1]} : vector<8x8xi32> to vector<8x1xi32>
    %30 = vector.broadcast %29 : vector<8x1xi32> to vector<8x128xi32>
    %31 = arith.cmpi eq, %30, %7 : vector<8x128xi32>
    %32 = arith.extui %31 : vector<8x128xi1> to vector<8x128xi32>
    %33 = arith.addi %28, %32 : vector<8x128xi32>
    %34 = vector.extract_strided_slice %3 {offsets = [0, 5], sizes = [8, 1], strides = [1, 1]} : vector<8x8xi32> to vector<8x1xi32>
    %35 = vector.broadcast %34 : vector<8x1xi32> to vector<8x128xi32>
    %36 = arith.cmpi eq, %35, %7 : vector<8x128xi32>
    %37 = arith.extui %36 : vector<8x128xi1> to vector<8x128xi32>
    %38 = arith.addi %33, %37 : vector<8x128xi32>
    %39 = vector.extract_strided_slice %3 {offsets = [0, 6], sizes = [8, 1], strides = [1, 1]} : vector<8x8xi32> to vector<8x1xi32>
    %40 = vector.broadcast %39 : vector<8x1xi32> to vector<8x128xi32>
    %41 = arith.cmpi eq, %40, %7 : vector<8x128xi32>
    %42 = arith.extui %41 : vector<8x128xi1> to vector<8x128xi32>
    %43 = arith.addi %38, %42 : vector<8x128xi32>
    %44 = vector.extract_strided_slice %3 {offsets = [0, 7], sizes = [8, 1], strides = [1, 1]} : vector<8x8xi32> to vector<8x1xi32>
    %45 = vector.broadcast %44 : vector<8x1xi32> to vector<8x128xi32>
    %46 = arith.cmpi eq, %45, %7 : vector<8x128xi32>
    %47 = arith.extui %46 : vector<8x128xi1> to vector<8x128xi32>
    %48 = arith.addi %43, %47 : vector<8x128xi32>
    %c0_3 = arith.constant 0 : index
    %c0_4 = arith.constant 0 : index
    %49 = vector.load %arg7[%c0_3, %c0_4] : memref<8x32xf32, #tpu.memory_space<vmem>>, vector<8x32xf32>
    %50 = arith.sitofp %48 : vector<8x128xi32> to vector<8x128xf32>
    %c0_5 = arith.constant 0 : index
    %c0_6 = arith.constant 0 : index
    %51 = vector.load %arg3[%c0_5, %c0_6] : memref<128x32xf32, #tpu.memory_space<vmem>>, vector<128x32xf32>
    %cst = arith.constant dense<0.000000e+00> : vector<8x32xf32>
    %52 = tpu.matmul %50, %51, %cst {dimension_numbers = #tpu.dot_dimension_numbers<[1], [0], [0], [1], [0, 0, 1, 1], [], []>} : vector<8x128xf32>, vector<128x32xf32>, vector<8x32xf32> -> vector<8x32xf32>
    %53 = arith.addf %49, %52 : vector<8x32xf32>
    %c0_7 = arith.constant 0 : index
    %c0_8 = arith.constant 0 : index
    %54 = vector.load %arg7[%c0_7, %c0_8] : memref<8x32xf32, #tpu.memory_space<vmem>>, vector<8x32xf32>
    tpu.vector_store %arg7[%c0_7, %c0_8], %53 {strides = array<i32>} : memref<8x32xf32, #tpu.memory_space<vmem>>, vector<8x32xf32>,
    %c0_i32_9 = arith.constant 0 : i32
    %55 = arith.cmpi eq, %arg1, %c0_i32_9 : i32
    %56 = arith.extui %55 : i1 to i32
    %c0_i32_10 = arith.constant 0 : i32
    %57 = arith.cmpi ne, %56, %c0_i32_10 : i32
    scf.if %57 {
      %c0_11 = arith.constant 0 : index
      %c0_12 = arith.constant 0 : index
      %58 = vector.load %arg7[%c0_11, %c0_12] : memref<8x32xf32, #tpu.memory_space<vmem>>, vector<8x32xf32>
      %c0_13 = arith.constant 0 : index
      %c0_14 = arith.constant 0 : index
      %59 = vector.load %arg4[%c0_13, %c0_14] : memref<32x128xf32, #tpu.memory_space<vmem>>, vector<32x128xf32>
      %cst_15 = arith.constant dense<0.000000e+00> : vector<8x128xf32>
      %60 = tpu.matmul %58, %59, %cst_15 {dimension_numbers = #tpu.dot_dimension_numbers<[1], [0], [0], [1], [0, 0, 1, 1], [], []>} : vector<8x32xf32>, vector<32x128xf32>, vector<8x128xf32> -> vector<8x128xf32>
      %c0_16 = arith.constant 0 : index
      %c0_17 = arith.constant 0 : index
      %61 = vector.load %arg5[%c0_16, %c0_17] : memref<1x128xf32, #tpu.memory_space<vmem>>, vector<1x128xf32>
      %62 = vector.broadcast %61 : vector<1x128xf32> to vector<8x128xf32>
      %63 = arith.addf %60, %62 : vector<8x128xf32>
      %c0_18 = arith.constant 0 : index
      %c0_19 = arith.constant 0 : index
      %64 = vector.load %arg6[%c0_18, %c0_19] : memref<8x128xf32, #tpu.memory_space<vmem>>, vector<8x128xf32>
      tpu.vector_store %arg6[%c0_18, %c0_19], %63 {strides = array<i32>} : memref<8x128xf32, #tpu.memory_space<vmem>>, vector<8x128xf32>,
    } else {
    }
    return
  }
  func.func @transform_0(%arg0: i32, %arg1: i32) -> (i32, i32) {
    %c0_i32 = arith.constant 0 : i32
    %c0_i32_0 = arith.constant 0 : i32
    return %arg0, %c0_i32 : i32, i32
  }
  func.func @transform_1(%arg0: i32, %arg1: i32) -> (i32, i32) {
    %c0_i32 = arith.constant 0 : i32
    %c0_i32_0 = arith.constant 0 : i32
    return %arg1, %c0_i32 : i32, i32
  }
  func.func @transform_2(%arg0: i32, %arg1: i32) -> (i32, i32) {
    %c0_i32 = arith.constant 0 : i32
    %c0_i32_0 = arith.constant 0 : i32
    %c0_i32_1 = arith.constant 0 : i32
    return %c0_i32, %c0_i32_0 : i32, i32
  }
  func.func @transform_3(%arg0: i32, %arg1: i32) -> (i32, i32) {
    %c0_i32 = arith.constant 0 : i32
    %c0_i32_0 = arith.constant 0 : i32
    %c0_i32_1 = arith.constant 0 : i32
    return %c0_i32, %c0_i32_0 : i32, i32
  }
  func.func @transform_4(%arg0: i32, %arg1: i32) -> (i32, i32) {
    %c0_i32 = arith.constant 0 : i32
    %c0_i32_0 = arith.constant 0 : i32
    return %arg0, %c0_i32 : i32, i32
  }
}

</mosaic_0001>

<llo_original>
// kernel: tpu_custom_call.1
$region0: #{tpu_custom_call.1}
  #allocation0 [shape = 'u32[]', space=smem, size = 0x4, offset = 0x4, fixed_abs, tag = 'smem constant byte address 0x4 - core index']
  #allocation1 [shape = 'u32[144,128]{1,0:T(1,128)}', space=vmem, size = 0x12000, scoped, tag = 'internal scratch']
  #allocation2 [shape = 'f32[8,32]{1,0:T(8,128)}', space=vmem, size = 0x1000, scoped, tag = 'scratch operand']
  %s0 = inlined_call_operand.vmem [shape: s32[8,8], index: 0, kind: input, shape index: {}]
  %s1 = inlined_call_operand.vmem [shape: f32[128,32], index: 1, kind: input, shape index: {}]
  %s2 = inlined_call_operand.vmem [shape: f32[32,128], index: 2, kind: input, shape index: {}]
  %s3 = inlined_call_operand.vmem [shape: f32[1,128], index: 3, kind: input, shape index: {}]
  %s4 = inlined_call_operand.hbm [shape: f32[8,128], index: 4, kind: output, shape index: {}]
  %s5 = sld [smem:[#allocation0]]
  $region34: #{tpu_custom_call.1} parent=0
    _
  %s7 = ssub.s32 1, %s5
  %s8 = scalar_select 0, %s7, %s5
  $region1: #{tpu_custom_call.1} parent=0
    #allocation3 [shape = 'u8[4096]{0}', space=vmem, size = 0x1000, scoped, tag = 'output window, operand 0, single buffered']
    #allocation4 [shape = 's32[1]{0}', space=sflag, size = 0x4, scoped, tag = 'scoped memory for tpu_custom_call.1']
    %9 = vsyncpa [#allocation4], 0
    // Predicated region
    $region2: #{tpu_custom_call.1} parent=1 // pred_check
      _
    $region3: #{tpu_custom_call.1} parent=1 // pred_check_branch
      %11 = sbr.rel (0) target = $region5
    $region4: #{tpu_custom_call.1} parent=1 // pred_region
      _
    $region5: #{tpu_custom_call.1} parent=1 // pred_fallthru
      _
    // Predicated region
    $region6: #{tpu_custom_call.1} parent=1 // pred_check
      _
    $region7: #{tpu_custom_call.1} parent=1 // pred_check_branch
      %13 = sbr.rel (0) target = $region9
    $region8: #{tpu_custom_call.1} parent=1 // pred_region
      _
    $region9: #{tpu_custom_call.1} parent=1 // pred_fallthru
      _
    // Predicated region
    $region10: #{tpu_custom_call.1} parent=1 // pred_check
      _
    $region11: #{tpu_custom_call.1} parent=1 // pred_check_branch
      %15 = sbr.rel (0) target = $region13
    $region12: #{tpu_custom_call.1} parent=1 // pred_region
      _
    $region13: #{tpu_custom_call.1} parent=1 // pred_fallthru
      _
    // Predicated region
    $region14: #{tpu_custom_call.1} parent=1 // pred_check
      _
    $region15: #{tpu_custom_call.1} parent=1 // pred_check_branch
      %17 = sbr.rel (0) target = $region17
    $region16: #{tpu_custom_call.1} parent=1 // pred_region
      _
    $region17: #{tpu_custom_call.1} parent=1 // pred_fallthru
      _
    %p18 = scmp.eq.s32.totalorder 0, 0
    // Predicated region
    $region18: #{tpu_custom_call.1} parent=1 // pred_check
      %p19 = pneg %p18
    $region19: #{tpu_custom_call.1} parent=1 // pred_check_branch
      %21 = sbr.rel (%p19) target = $region21
    $region20: #{tpu_custom_call.1} parent=1 // pred_region
      %vm22 = vcmask 261120
      %23 = vst.msk [vmem:[#allocation2] sm:$0xff] %vm22, 0.0
    $region21: #{tpu_custom_call.1} parent=1 // pred_fallthru
      _
    %v24 = vld [vmem:[%s0] sm:$0xff]
    %s25 = smul.u32 0, 128
    %v26 = vlaneseq
    %v27 = vand.u32 %v26, 127
    %v28 = vstv %s25
    %v29 = vadd.s32 %v27, %v28
    %30 = vset.pattern.permute.xlu0 0
    %31 = vperm.xlu0 %30, %v24
    %v32 = vpop.permute.xlu0 %31
    %vm33 = vcmp.eq.s32.totalorder %v32, %v29
    %v34 = vsel %vm33, 1, 0
    %35 = vset.pattern.permute.xlu0 1
    %36 = vperm.xlu0 %35, %v24
    %v37 = vpop.permute.xlu0 %36
    %vm38 = vcmp.eq.s32.totalorder %v37, %v29
    %v39 = vsel %vm38, 1, 0
    %v40 = vadd.s32 %v34, %v39
    %41 = vset.pattern.permute.xlu0 2
    %42 = vperm.xlu0 %41, %v24
    %v43 = vpop.permute.xlu0 %42
    %vm44 = vcmp.eq.s32.totalorder %v43, %v29
    %v45 = vsel %vm44, 1, 0
    %v46 = vadd.s32 %v40, %v45
    %47 = vset.pattern.permute.xlu0 3
    %48 = vperm.xlu0 %47, %v24
    %v49 = vpop.permute.xlu0 %48
    %vm50 = vcmp.eq.s32.totalorder %v49, %v29
    %v51 = vsel %vm50, 1, 0
    %v52 = vadd.s32 %v46, %v51
    %53 = vset.pattern.permute.xlu0 4
    %54 = vperm.xlu0 %53, %v24
    %v55 = vpop.permute.xlu0 %54
    %vm56 = vcmp.eq.s32.totalorder %v55, %v29
    %v57 = vsel %vm56, 1, 0
    %v58 = vadd.s32 %v52, %v57
    %59 = vset.pattern.permute.xlu0 5
    %60 = vperm.xlu0 %59, %v24
    %v61 = vpop.permute.xlu0 %60
    %vm62 = vcmp.eq.s32.totalorder %v61, %v29
    %v63 = vsel %vm62, 1, 0
    %v64 = vadd.s32 %v58, %v63
    %65 = vset.pattern.permute.xlu0 6
    %66 = vperm.xlu0 %65, %v24
    %v67 = vpop.permute.xlu0 %66
    %vm68 = vcmp.eq.s32.totalorder %v67, %v29
    %v69 = vsel %vm68, 1, 0
    %v70 = vadd.s32 %v64, %v69
    %71 = vset.pattern.permute.xlu0 7
    %72 = vperm.xlu0 %71, %v24
    %v73 = vpop.permute.xlu0 %72
    %vm74 = vcmp.eq.s32.totalorder %v73, %v29
    %v75 = vsel %vm74, 1, 0
    %v76 = vadd.s32 %v70, %v75
    %v77 = vld [vmem:[#allocation2] sm:$0xff]
    %v78 = vcvt.s32.f32 %v76
    %v79 = vld [vmem:[%s1] sm:$0xff]
    %v80 = vld [vmem:[%s1 + $0x8] sm:$0xff]
    %v81 = vld [vmem:[%s1 + $0x10] sm:$0xff]
    %v82 = vld [vmem:[%s1 + $0x18] sm:$0xff]
    %v83 = vld [vmem:[%s1 + $0x20] sm:$0xff]
    %v84 = vld [vmem:[%s1 + $0x28] sm:$0xff]
    %v85 = vld [vmem:[%s1 + $0x30] sm:$0xff]
    %v86 = vld [vmem:[%s1 + $0x38] sm:$0xff]
    %v87 = vld [vmem:[%s1 + $0x40] sm:$0xff]
    %v88 = vld [vmem:[%s1 + $0x48] sm:$0xff]
    %v89 = vld [vmem:[%s1 + $0x50] sm:$0xff]
    %v90 = vld [vmem:[%s1 + $0x58] sm:$0xff]
    %v91 = vld [vmem:[%s1 + $0x60] sm:$0xff]
    %v92 = vld [vmem:[%s1 + $0x68] sm:$0xff]
    %v93 = vld [vmem:[%s1 + $0x70] sm:$0xff]
    %v94 = vld [vmem:[%s1 + $0x78] sm:$0xff]
    %95 = vmatprep.subr.mxu0 0.0
    %96 = vmatpush1.msra.mxu0 %v79
    %97 = vmatprep.subr.mxu0 0.0
    %98 = vmatpush1.msra.mxu0 %v80
    %99 = vmatprep.subr.mxu0 0.0
    %100 = vmatpush1.msra.mxu0 %v81
    %101 = vmatprep.subr.mxu0 0.0
    %102 = vmatpush1.msra.mxu0 %v82
    %103 = vmatprep.subr.mxu0 0.0
    %104 = vmatpush1.msra.mxu0 %v83
    %105 = vmatprep.subr.mxu0 0.0
    %106 = vmatpush1.msra.mxu0 %v84
    %107 = vmatprep.subr.mxu0 0.0
    %108 = vmatpush1.msra.mxu0 %v85
    %109 = vmatprep.subr.mxu0 0.0
    %110 = vmatpush1.msra.mxu0 %v86
    %111 = vmatprep.subr.mxu0 0.0
    %112 = vmatpush1.msra.mxu0 %v87
    %113 = vmatprep.subr.mxu0 0.0
    %114 = vmatpush1.msra.mxu0 %v88
    %115 = vmatprep.subr.mxu0 0.0
    %116 = vmatpush1.msra.mxu0 %v89
    %117 = vmatprep.subr.mxu0 0.0
    %118 = vmatpush1.msra.mxu0 %v90
    %119 = vmatprep.subr.mxu0 0.0
    %120 = vmatpush1.msra.mxu0 %v91
    %121 = vmatprep.subr.mxu0 0.0
    %122 = vmatpush1.msra.mxu0 %v92
    %123 = vmatprep.subr.mxu0 0.0
    %124 = vmatpush1.msra.mxu0 %v93
    %125 = vmatprep.subr.mxu0 0.0
    %126 = vmatpush1.msra.mxu0 %v94
    %127 = vmatprep.subr.mxu0 0.0
    %128 = vmatpush1.msra.mxu0 0.0
    %129 = vmatprep.subr.mxu0 0.0
    %130 = vmatpush1.msra.mxu0 0.0
    %131 = vmatprep.subr.mxu0 0.0
    %132 = vmatpush1.msra.mxu0 0.0
    %133 = vmatprep.subr.mxu0 0.0
    %134 = vmatpush1.msra.mxu0 0.0
    %135 = vmatprep.subr.mxu0 0.0
    %136 = vmatpush1.msra.mxu0 0.0
    %137 = vmatprep.subr.mxu0 0.0
    %138 = vmatpush1.msra.mxu0 0.0
    %139 = vmatprep.subr.mxu0 0.0
    %140 = vmatpush1.msra.mxu0 0.0
    %141 = vmatprep.subr.mxu0 0.0
    %142 = vmatpush1.msra.mxu0 0.0
    %143 = vmatprep.subr.mxu0 0.0
    %144 = vmatpush1.msra.mxu0 0.0
    %145 = vmatprep.subr.mxu0 0.0
    %146 = vmatpush1.msra.mxu0 0.0
    %147 = vmatprep.subr.mxu0 0.0
    %148 = vmatpush1.msra.mxu0 0.0
    %149 = vmatprep.subr.mxu0 0.0
    %150 = vmatpush1.msra.mxu0 0.0
    %151 = vmatprep.subr.mxu0 0.0
    %152 = vmatpush1.msra.mxu0 0.0
    %153 = vmatprep.subr.mxu0 0.0
    %154 = vmatpush1.msra.mxu0 0.0
    %155 = vmatprep.subr.mxu0 0.0
    %156 = vmatpush1.msra.mxu0 0.0
    %157 = vmatprep.subr.mxu0 0.0
    %158 = vmatpush1.msra.mxu0 0.0
    %159 = vmatprep.mubr.f32.mxu0 0.0
    %160 = vmatmul.mubr.f32.gmra.mrb[0].mxu0 %v78
    %v161 = vpop.f32.mrb[0].mxu0
    %v162 = vadd.f32 0.0, %v161
    %v163 = vpop.f32.mrb[0].mxu0
    %164 = vdwg.mxu0
    %v165 = vadd.f32 %v77, %v162
    %vm166 = vcmask 261120
    %167 = vst.msk [vmem:[#allocation2] sm:$0xff] %vm166, %v165
    // Predicated region
    $region22: #{tpu_custom_call.1} parent=1 // pred_check
      %p168 = pneg %p18
    $region23: #{tpu_custom_call.1} parent=1 // pred_check_branch
      %170 = sbr.rel (%p168) target = $region25
    $region24: #{tpu_custom_call.1} parent=1 // pred_region
      %v171 = vld [vmem:[#allocation2] sm:$0xff]
      %v172 = vld [vmem:[%s2] sm:$0xff]
      %v173 = vld [vmem:[%s2 + $0x8] sm:$0xff]
      %v174 = vld [vmem:[%s2 + $0x10] sm:$0xff]
      %v175 = vld [vmem:[%s2 + $0x18] sm:$0xff]
      %v176 = vld [vmem:[%s3] sm:$0x1]
      %v178 = vlaneseq
      %v179 = vshrl.u32 %v178, 7
      %v180 = vsub.s32 0, %v179
      %v181 = vrot.slane %v176, %v180
      %v184 = vsel %vm166, %v171, 0
      %186 = vmatprep.subr.mxu0 0.0
      %187 = vmatpush1.msra.mxu0 %v172
      %188 = vmatprep.subr.mxu0 0.0
      %189 = vmatpush1.msra.mxu0 %v173
      %190 = vmatprep.subr.mxu0 0.0
      %191 = vmatpush1.msra.mxu0 %v174
      %192 = vmatprep.subr.mxu0 0.0
      %193 = vmatpush1.msra.mxu0 %v175
      %194 = vmatprep.subr.mxu0 0.0
      %195 = vmatpush1.msra.mxu0 0.0
      %196 = vmatprep.subr.mxu0 0.0
      %197 = vmatpush1.msra.mxu0 0.0
      %198 = vmatprep.subr.mxu0 0.0
      %199 = vmatpush1.msra.mxu0 0.0
      %200 = vmatprep.subr.mxu0 0.0
      %201 = vmatpush1.msra.mxu0 0.0
      %202 = vmatprep.subr.mxu0 0.0
      %203 = vmatpush1.msra.mxu0 0.0
      %204 = vmatprep.subr.mxu0 0.0
      %205 = vmatpush1.msra.mxu0 0.0
      %206 = vmatprep.subr.mxu0 0.0
      %207 = vmatpush1.msra.mxu0 0.0
      %208 = vmatprep.subr.mxu0 0.0
      %209 = vmatpush1.msra.mxu0 0.0
      %210 = vmatprep.subr.mxu0 0.0
      %211 = vmatpush1.msra.mxu0 0.0
      %212 = vmatprep.subr.mxu0 0.0
      %213 = vmatpush1.msra.mxu0 0.0
      %214 = vmatprep.subr.mxu0 0.0
      %215 = vmatpush1.msra.mxu0 0.0
      %216 = vmatprep.subr.mxu0 0.0
      %217 = vmatpush1.msra.mxu0 0.0
      %218 = vmatprep.subr.mxu0 0.0
      %219 = vmatpush1.msra.mxu0 0.0
      %220 = vmatprep.subr.mxu0 0.0
      %221 = vmatpush1.msra.mxu0 0.0
      %222 = vmatprep.subr.mxu0 0.0
      %223 = vmatpush1.msra.mxu0 0.0
      %224 = vmatprep.subr.mxu0 0.0
      %225 = vmatpush1.msra.mxu0 0.0
      %226 = vmatprep.subr.mxu0 0.0
      %227 = vmatpush1.msra.mxu0 0.0
      %228 = vmatprep.subr.mxu0 0.0
      %229 = vmatpush1.msra.mxu0 0.0
      %230 = vmatprep.subr.mxu0 0.0
      %231 = vmatpush1.msra.mxu0 0.0
      %232 = vmatprep.subr.mxu0 0.0
      %233 = vmatpush1.msra.mxu0 0.0
      %234 = vmatprep.subr.mxu0 0.0
      %235 = vmatpush1.msra.mxu0 0.0
      %236 = vmatprep.subr.mxu0 0.0
      %237 = vmatpush1.msra.mxu0 0.0
      %238 = vmatprep.subr.mxu0 0.0
      %239 = vmatpush1.msra.mxu0 0.0
      %240 = vmatprep.subr.mxu0 0.0
      %241 = vmatpush1.msra.mxu0 0.0
      %242 = vmatprep.subr.mxu0 0.0
      %243 = vmatpush1.msra.mxu0 0.0
      %244 = vmatprep.subr.mxu0 0.0
      %245 = vmatpush1.msra.mxu0 0.0
      %246 = vmatprep.subr.mxu0 0.0
      %247 = vmatpush1.msra.mxu0 0.0
      %248 = vmatprep.subr.mxu0 0.0
      %249 = vmatpush1.msra.mxu0 0.0
      %250 = vmatprep.mubr.f32.mxu0 0.0
      %251 = vmatmul.mubr.f32.gmra.mrb[0].mxu0 %v184
      %v252 = vpop.f32.mrb[0].mxu0
      %v253 = vadd.f32 %v181, %v252
      %v254 = vpop.f32.mrb[0].mxu0
      %255 = vdwg.mxu0
      %256 = vst [vmem:[#allocation3] sm:$0xff] %v253
    $region25: #{tpu_custom_call.1} parent=1 // pred_fallthru
      _
    // Predicated region
    $region26: #{tpu_custom_call.1} parent=1 // pred_check
      _
    $region27: #{tpu_custom_call.1} parent=1 // pred_check_branch
      %258 = sbr.rel (0) target = $region29
    $region28: #{tpu_custom_call.1} parent=1 // pred_region
      %s260 = ssub.s32 128, 128
      %261 = vsyncadd [#allocation4], %s260
      %s263 = sshll.u32 [#allocation3], 4
      %s264 = int_to_ptr.vmem [resolvable:$true] %s263
      %266 = dma.vmem_to_hbm [thread:$0]  %s264, 128, %s4, [#allocation4]
    $region29: #{tpu_custom_call.1} parent=1 // pred_fallthru
      _
    // Predicated region
    $region30: #{tpu_custom_call.1} parent=1 // pred_check
      _
    $region31: #{tpu_custom_call.1} parent=1 // pred_check_branch
      %268 = sbr.rel (0) target = $region33
    $region32: #{tpu_custom_call.1} parent=1 // pred_region
      %269 = dma.done [#allocation4], 128
    $region33: #{tpu_custom_call.1} parent=1 // pred_fallthru
      _
    %270 = vsyncpa [#allocation4], 1

// kernel: tpu_custom_call.1
$region0: #{tpu_custom_call.1}
  #allocation0 [shape = 'u32[]', space=smem, size = 0x4, offset = 0x4, fixed_abs, tag = 'smem constant byte address 0x4 - core index']
  #allocation1 [shape = 'u32[144,128]{1,0:T(1,128)}', space=vmem, size = 0x12000, scoped, tag = 'internal scratch']
  #allocation2 [shape = 'f32[8,32]{1,0:T(8,128)}', space=vmem, size = 0x1000, scoped, tag = 'scratch operand']
  %s0 = inlined_call_operand.vmem [shape: s32[8,8], index: 0, kind: input, shape index: {}]
  %s1 = inlined_call_operand.vmem [shape: f32[128,32], index: 1, kind: input, shape index: {}]
  %s2 = inlined_call_operand.vmem [shape: f32[32,128], index: 2, kind: input, shape index: {}]
  %s3 = inlined_call_operand.vmem [shape: f32[1,128], index: 3, kind: input, shape index: {}]
  %s4 = inlined_call_operand.hbm [shape: f32[8,128], index: 4, kind: output, shape index: {}]
  %s5 = sld [smem:[#allocation0]]
  $region34: #{tpu_custom_call.1} parent=0
    _
  %s7 = ssub.s32 1, %s5
  %s8 = scalar_select 0, %s7, %s5
  $region1: #{tpu_custom_call.1} parent=0
    #allocation3 [shape = 'u8[4096]{0}', space=vmem, size = 0x1000, scoped, tag = 'output window, operand 0, single buffered']
    #allocation4 [shape = 's32[1]{0}', space=sflag, size = 0x4, scoped, tag = 'scoped memory for tpu_custom_call.1']
    %9 = vsyncpa [#allocation4], 0
    // Predicated region
    $region2: #{tpu_custom_call.1} parent=1 // pred_check
      _
    $region3: #{tpu_custom_call.1} parent=1 // pred_check_branch
      %11 = sbr.rel (0) target = $region5
    $region4: #{tpu_custom_call.1} parent=1 // pred_region
      _
    $region5: #{tpu_custom_call.1} parent=1 // pred_fallthru
      _
    // Predicated region
    $region6: #{tpu_custom_call.1} parent=1 // pred_check
      _
    $region7: #{tpu_custom_call.1} parent=1 // pred_check_branch
      %13 = sbr.rel (0) target = $region9
    $region8: #{tpu_custom_call.1} parent=1 // pred_region
      _
    $region9: #{tpu_custom_call.1} parent=1 // pred_fallthru
      _
    // Predicated region
    $region10: #{tpu_custom_call.1} parent=1 // pred_check
      _
    $region11: #{tpu_custom_call.1} parent=1 // pred_check_branch
      %15 = sbr.rel (0) target = $region13
    $region12: #{tpu_custom_call.1} parent=1 // pred_region
      _
    $region13: #{tpu_custom_call.1} parent=1 // pred_fallthru
      _
    // Predicated region
    $region14: #{tpu_custom_call.1} parent=1 // pred_check
      _
    $region15: #{tpu_custom_call.1} parent=1 // pred_check_branch
      %17 = sbr.rel (0) target = $region17
    $region16: #{tpu_custom_call.1} parent=1 // pred_region
      _
    $region17: #{tpu_custom_call.1} parent=1 // pred_fallthru
      _
    %p18 = scmp.eq.s32.totalorder 0, 0
    // Predicated region
    $region18: #{tpu_custom_call.1} parent=1 // pred_check
      %p19 = pneg %p18
    $region19: #{tpu_custom_call.1} parent=1 // pred_check_branch
      %21 = sbr.rel (%p19) target = $region21
    $region20: #{tpu_custom_call.1} parent=1 // pred_region
      %vm22 = vcmask 261120
      %23 = vst.msk [vmem:[#allocation2] sm:$0xff] %vm22, 0.0
    $region21: #{tpu_custom_call.1} parent=1 // pred_fallthru
      _
    %v24 = vld [vmem:[%s0] sm:$0xff]
    %s25 = smul.u32 0, 128
    %v26 = vlaneseq
    %v27 = vand.u32 %v26, 127
    %v28 = vstv %s25
    %v29 = vadd.s32 %v27, %v28
    %30 = vset.pattern.permute.xlu0 0
    %31 = vperm.xlu0 %30, %v24
    %v32 = vpop.permute.xlu0 %31
    %vm33 = vcmp.eq.s32.totalorder %v32, %v29
    %v34 = vsel %vm33, 1, 0
    %35 = vset.pattern.permute.xlu0 1
    %36 = vperm.xlu0 %35, %v24
    %v37 = vpop.permute.xlu0 %36
    %vm38 = vcmp.eq.s32.totalorder %v37, %v29
    %v39 = vsel %vm38, 1, 0
    %v40 = vadd.s32 %v34, %v39
    %41 = vset.pattern.permute.xlu0 2
    %42 = vperm.xlu0 %41, %v24
    %v43 = vpop.permute.xlu0 %42
    %vm44 = vcmp.eq.s32.totalorder %v43, %v29
    %v45 = vsel %vm44, 1, 0
    %v46 = vadd.s32 %v40, %v45
    %47 = vset.pattern.permute.xlu0 3
    %48 = vperm.xlu0 %47, %v24
    %v49 = vpop.permute.xlu0 %48
    %vm50 = vcmp.eq.s32.totalorder %v49, %v29
    %v51 = vsel %vm50, 1, 0
    %v52 = vadd.s32 %v46, %v51
    %53 = vset.pattern.permute.xlu0 4
    %54 = vperm.xlu0 %53, %v24
    %v55 = vpop.permute.xlu0 %54
    %vm56 = vcmp.eq.s32.totalorder %v55, %v29
    %v57 = vsel %vm56, 1, 0
    %v58 = vadd.s32 %v52, %v57
    %59 = vset.pattern.permute.xlu0 5
    %60 = vperm.xlu0 %59, %v24
    %v61 = vpop.permute.xlu0 %60
    %vm62 = vcmp.eq.s32.totalorder %v61, %v29
    %v63 = vsel %vm62, 1, 0
    %v64 = vadd.s32 %v58, %v63
    %65 = vset.pattern.permute.xlu0 6
    %66 = vperm.xlu0 %65, %v24
    %v67 = vpop.permute.xlu0 %66
    %vm68 = vcmp.eq.s32.totalorder %v67, %v29
    %v69 = vsel %vm68, 1, 0
    %v70 = vadd.s32 %v64, %v69
    %71 = vset.pattern.permute.xlu0 7
    %72 = vperm.xlu0 %71, %v24
    %v73 = vpop.permute.xlu0 %72
    %vm74 = vcmp.eq.s32.totalorder %v73, %v29
    %v75 = vsel %vm74, 1, 0
    %v76 = vadd.s32 %v70, %v75
    %v77 = vld [vmem:[#allocation2] sm:$0xff]
    %v78 = vcvt.s32.f32 %v76
    %v79 = vld [vmem:[%s1] sm:$0xff]
    %v80 = vld [vmem:[%s1 + $0x8] sm:$0xff]
    %v81 = vld [vmem:[%s1 + $0x10] sm:$0xff]
    %v82 = vld [vmem:[%s1 + $0x18] sm:$0xff]
    %v83 = vld [vmem:[%s1 + $0x20] sm:$0xff]
    %v84 = vld [vmem:[%s1 + $0x28] sm:$0xff]
    %v85 = vld [vmem:[%s1 + $0x30] sm:$0xff]
    %v86 = vld [vmem:[%s1 + $0x38] sm:$0xff]
    %v87 = vld [vmem:[%s1 + $0x40] sm:$0xff]
    %v88 = vld [vmem:[%s1 + $0x48] sm:$0xff]
    %v89 = vld [vmem:[%s1 + $0x50] sm:$0xff]
    %v90 = vld [vmem:[%s1 + $0x58] sm:$0xff]
    %v91 = vld [vmem:[%s1 + $0x60] sm:$0xff]
    %v92 = vld [vmem:[%s1 + $0x68] sm:$0xff]
    %v93 = vld [vmem:[%s1 + $0x70] sm:$0xff]
    %v94 = vld [vmem:[%s1 + $0x78] sm:$0xff]
    %95 = vmatprep.subr.mxu0 0.0
    %96 = vmatpush1.msra.mxu0 %v79
    %97 = vmatprep.subr.mxu0 0.0
    %98 = vmatpush1.msra.mxu0 %v80
    %99 = vmatprep.subr.mxu0 0.0
    %100 = vmatpush1.msra.mxu0 %v81
    %101 = vmatprep.subr.mxu0 0.0
    %102 = vmatpush1.msra.mxu0 %v82
    %103 = vmatprep.subr.mxu0 0.0
    %104 = vmatpush1.msra.mxu0 %v83
    %105 = vmatprep.subr.mxu0 0.0
    %106 = vmatpush1.msra.mxu0 %v84
    %107 = vmatprep.subr.mxu0 0.0
    %108 = vmatpush1.msra.mxu0 %v85
    %109 = vmatprep.subr.mxu0 0.0
    %110 = vmatpush1.msra.mxu0 %v86
    %111 = vmatprep.subr.mxu0 0.0
    %112 = vmatpush1.msra.mxu0 %v87
    %113 = vmatprep.subr.mxu0 0.0
    %114 = vmatpush1.msra.mxu0 %v88
    %115 = vmatprep.subr.mxu0 0.0
    %116 = vmatpush1.msra.mxu0 %v89
    %117 = vmatprep.subr.mxu0 0.0
    %118 = vmatpush1.msra.mxu0 %v90
    %119 = vmatprep.subr.mxu0 0.0
    %120 = vmatpush1.msra.mxu0 %v91
    %121 = vmatprep.subr.mxu0 0.0
    %122 = vmatpush1.msra.mxu0 %v92
    %123 = vmatprep.subr.mxu0 0.0
    %124 = vmatpush1.msra.mxu0 %v93
    %125 = vmatprep.subr.mxu0 0.0
    %126 = vmatpush1.msra.mxu0 %v94
    %127 = vmatprep.subr.mxu0 0.0
    %128 = vmatpush1.msra.mxu0 0.0
    %129 = vmatprep.subr.mxu0 0.0
    %130 = vmatpush1.msra.mxu0 0.0
    %131 = vmatprep.subr.mxu0 0.0
    %132 = vmatpush1.msra.mxu0 0.0
    %133 = vmatprep.subr.mxu0 0.0
    %134 = vmatpush1.msra.mxu0 0.0
    %135 = vmatprep.subr.mxu0 0.0
    %136 = vmatpush1.msra.mxu0 0.0
    %137 = vmatprep.subr.mxu0 0.0
    %138 = vmatpush1.msra.mxu0 0.0
    %139 = vmatprep.subr.mxu0 0.0
    %140 = vmatpush1.msra.mxu0 0.0
    %141 = vmatprep.subr.mxu0 0.0
    %142 = vmatpush1.msra.mxu0 0.0
    %143 = vmatprep.subr.mxu0 0.0
    %144 = vmatpush1.msra.mxu0 0.0
    %145 = vmatprep.subr.mxu0 0.0
    %146 = vmatpush1.msra.mxu0 0.0
    %147 = vmatprep.subr.mxu0 0.0
    %148 = vmatpush1.msra.mxu0 0.0
    %149 = vmatprep.subr.mxu0 0.0
    %150 = vmatpush1.msra.mxu0 0.0
    %151 = vmatprep.subr.mxu0 0.0
    %152 = vmatpush1.msra.mxu0 0.0
    %153 = vmatprep.subr.mxu0 0.0
    %154 = vmatpush1.msra.mxu0 0.0
    %155 = vmatprep.subr.mxu0 0.0
    %156 = vmatpush1.msra.mxu0 0.0
    %157 = vmatprep.subr.mxu0 0.0
    %158 = vmatpush1.msra.mxu0 0.0
    %159 = vmatprep.mubr.f32.mxu0 0.0
    %160 = vmatmul.mubr.f32.gmra.mrb[0].mxu0 %v78
    %v161 = vpop.f32.mrb[0].mxu0
    %v162 = vadd.f32 0.0, %v161
    %v163 = vpop.f32.mrb[0].mxu0
    %164 = vdwg.mxu0
    %v165 = vadd.f32 %v77, %v162
    %vm166 = vcmask 261120
    %167 = vst.msk [vmem:[#allocation2] sm:$0xff] %vm166, %v165
    // Predicated region
    $region22: #{tpu_custom_call.1} parent=1 // pred_check
      %p168 = pneg %p18
    $region23: #{tpu_custom_call.1} parent=1 // pred_check_branch
      %170 = sbr.rel (%p168) target = $region25
    $region24: #{tpu_custom_call.1} parent=1 // pred_region
      %v171 = vld [vmem:[#allocation2] sm:$0xff]
      %v172 = vld [vmem:[%s2] sm:$0xff]
      %v173 = vld [vmem:[%s2 + $0x8] sm:$0xff]
      %v174 = vld [vmem:[%s2 + $0x10] sm:$0xff]
      %v175 = vld [vmem:[%s2 + $0x18] sm:$0xff]
      %v176 = vld [vmem:[%s3] sm:$0x1]
      %v178 = vlaneseq
      %v179 = vshrl.u32 %v178, 7
      %v180 = vsub.s32 0, %v179
      %v181 = vrot.slane %v176, %v180
      %v184 = vsel %vm166, %v171, 0
      %186 = vmatprep.subr.mxu0 0.0
      %187 = vmatpush1.msra.mxu0 %v172
      %188 = vmatprep.subr.mxu0 0.0
      %189 = vmatpush1.msra.mxu0 %v173
      %190 = vmatprep.subr.mxu0 0.0
      %191 = vmatpush1.msra.mxu0 %v174
      %192 = vmatprep.subr.mxu0 0.0
      %193 = vmatpush1.msra.mxu0 %v175
      %194 = vmatprep.subr.mxu0 0.0
      %195 = vmatpush1.msra.mxu0 0.0
      %196 = vmatprep.subr.mxu0 0.0
      %197 = vmatpush1.msra.mxu0 0.0
      %198 = vmatprep.subr.mxu0 0.0
      %199 = vmatpush1.msra.mxu0 0.0
      %200 = vmatprep.subr.mxu0 0.0
      %201 = vmatpush1.msra.mxu0 0.0
      %202 = vmatprep.subr.mxu0 0.0
      %203 = vmatpush1.msra.mxu0 0.0
      %204 = vmatprep.subr.mxu0 0.0
      %205 = vmatpush1.msra.mxu0 0.0
      %206 = vmatprep.subr.mxu0 0.0
      %207 = vmatpush1.msra.mxu0 0.0
      %208 = vmatprep.subr.mxu0 0.0
      %209 = vmatpush1.msra.mxu0 0.0
      %210 = vmatprep.subr.mxu0 0.0
      %211 = vmatpush1.msra.mxu0 0.0
      %212 = vmatprep.subr.mxu0 0.0
      %213 = vmatpush1.msra.mxu0 0.0
      %214 = vmatprep.subr.mxu0 0.0
      %215 = vmatpush1.msra.mxu0 0.0
      %216 = vmatprep.subr.mxu0 0.0
      %217 = vmatpush1.msra.mxu0 0.0
      %218 = vmatprep.subr.mxu0 0.0
      %219 = vmatpush1.msra.mxu0 0.0
      %220 = vmatprep.subr.mxu0 0.0
      %221 = vmatpush1.msra.mxu0 0.0
      %222 = vmatprep.subr.mxu0 0.0
      %223 = vmatpush1.msra.mxu0 0.0
      %224 = vmatprep.subr.mxu0 0.0
      %225 = vmatpush1.msra.mxu0 0.0
      %226 = vmatprep.subr.mxu0 0.0
      %227 = vmatpush1.msra.mxu0 0.0
      %228 = vmatprep.subr.mxu0 0.0
      %229 = vmatpush1.msra.mxu0 0.0
      %230 = vmatprep.subr.mxu0 0.0
      %231 = vmatpush1.msra.mxu0 0.0
      %232 = vmatprep.subr.mxu0 0.0
      %233 = vmatpush1.msra.mxu0 0.0
      %234 = vmatprep.subr.mxu0 0.0
      %235 = vmatpush1.msra.mxu0 0.0
      %236 = vmatprep.subr.mxu0 0.0
      %237 = vmatpush1.msra.mxu0 0.0
      %238 = vmatprep.subr.mxu0 0.0
      %239 = vmatpush1.msra.mxu0 0.0
      %240 = vmatprep.subr.mxu0 0.0
      %241 = vmatpush1.msra.mxu0 0.0
      %242 = vmatprep.subr.mxu0 0.0
      %243 = vmatpush1.msra.mxu0 0.0
      %244 = vmatprep.subr.mxu0 0.0
      %245 = vmatpush1.msra.mxu0 0.0
      %246 = vmatprep.subr.mxu0 0.0
      %247 = vmatpush1.msra.mxu0 0.0
      %248 = vmatprep.subr.mxu0 0.0
      %249 = vmatpush1.msra.mxu0 0.0
      %250 = vmatprep.mubr.f32.mxu0 0.0
      %251 = vmatmul.mubr.f32.gmra.mrb[0].mxu0 %v184
      %v252 = vpop.f32.mrb[0].mxu0
      %v253 = vadd.f32 %v181, %v252
      %v254 = vpop.f32.mrb[0].mxu0
      %255 = vdwg.mxu0
      %256 = vst [vmem:[#allocation3] sm:$0xff] %v253
    $region25: #{tpu_custom_call.1} parent=1 // pred_fallthru
      _
    // Predicated region
    $region26: #{tpu_custom_call.1} parent=1 // pred_check
      _
    $region27: #{tpu_custom_call.1} parent=1 // pred_check_branch
      %258 = sbr.rel (0) target = $region29
    $region28: #{tpu_custom_call.1} parent=1 // pred_region
      %s260 = ssub.s32 128, 128
      %261 = vsyncadd [#allocation4], %s260
      %s263 = sshll.u32 [#allocation3], 4
      %s264 = int_to_ptr.vmem [resolvable:$true] %s263
      %266 = dma.vmem_to_hbm [thread:$0]  %s264, 128, %s4, [#allocation4]
    $region29: #{tpu_custom_call.1} parent=1 // pred_fallthru
      _
    // Predicated region
    $region30: #{tpu_custom_call.1} parent=1 // pred_check
      _
    $region31: #{tpu_custom_call.1} parent=1 // pred_check_branch
      %268 = sbr.rel (0) target = $region33
    $region32: #{tpu_custom_call.1} parent=1 // pred_region
      %269 = dma.done [#allocation4], 128
    $region33: #{tpu_custom_call.1} parent=1 // pred_fallthru
      _
    %270 = vsyncpa [#allocation4], 1

</llo_original>
